<compile_context>
chip_gen: v7x
topology: tpu7x:2x2x1
jax: 0.10.0
libtpu: 0.0.40
codegen_flags: <defaults>
</compile_context>

<pallas_src>
import math
import jax
import jax.numpy as jnp
from jax.experimental import pallas as pl
from jax.experimental.pallas import tpu as pltpu

EMBED_DIM = 32      # config.model.embed_dim
IN_DIM = 2          # model_x : Linear(2, EMBED_DIM)
OUT_DIM = 2         # model   : Linear(EMBED_DIM, 2)
MAX_PERIOD = 10000.0


def toynet_kernel(x_ref, freqs_ref, phase_ref, w1t_ref, b1_ref, w2_ref, b2_ref, o_ref):
    # Transposed, lane-dense layout: batch maps to TPU lanes (last dim).
    #   x_ref    : [3, TILE_B]           (row 0 = timestep, rows 1..2 = features)
    #   freqs/phase : [E, 1]             (cos-phase trick table)
    #   w1t_ref  : [E, IN_DIM]           b1_ref : [E, 1]
    #   w2_ref   : [E, OUT_DIM]          b2_ref : [OUT_DIM, 1]
    #   o_ref    : [OUT_DIM, TILE_B]
    t = x_ref[0:1, :]                    # [1, TB]
    x1 = x_ref[1:2, :]                   # [1, TB]
    x2 = x_ref[2:3, :]                   # [1, TB]

    # ---- timestep embedding: z[e,b] = cos(t[b]*freqs[e] + phase[e]) ----
    # phase = 0 for the cos half, -pi/2 for the sin half; one EUP pass, no concat.
    z = jnp.cos(t * freqs_ref[...] + phase_ref[...])            # [E, TB]

    # ---- layer 1 (K=2) as VPU broadcast-FMAs: h = ReLU(W1^T x + b1) + z ----
    h = w1t_ref[:, 0:1] * x1 + w1t_ref[:, 1:2] * x2 + b1_ref[...]   # [E, TB]
    h = jnp.maximum(h, 0.0) + z

    # ---- layer 2 (N=2) as VPU mul + sublane reduce ----
    o_ref[0:1, :] = jnp.sum(h * w2_ref[:, 0:1], axis=0, keepdims=True) + b2_ref[0:1, :]
    o_ref[1:2, :] = jnp.sum(h * w2_ref[:, 1:2], axis=0, keepdims=True) + b2_ref[1:2, :]


def toynet_forward(x, w1, b1, w2, b2, *, tile_b=8192):
    """ToyNet forward.

    x  : [B, 3] float32
    w1 : [IN_DIM, EMBED_DIM]   (pre-transposed PyTorch Linear(2, E).weight)
    b1 : [EMBED_DIM]
    w2 : [EMBED_DIM, OUT_DIM]  (pre-transposed PyTorch Linear(E, 2).weight)
    b2 : [OUT_DIM]
    returns [B, OUT_DIM] float32
    """
    B = x.shape[0]
    E = EMBED_DIM
    half = E // 2

    # Tile the batch onto lanes: multiple of 128, capped so the per-step VMEM
    # footprint (a few MB of [E, TILE_B] f32 intermediates + double-buffered
    # I/O tiles) fits comfortably inside v7x's smaller VMEM as well.
    tile_b = min(int(tile_b), max(128, pl.next_power_of_2(max(B, 1))))
    tile_b = max(128, (tile_b // 128) * 128)
    b_pad = pl.cdiv(B, tile_b) * tile_b
    grid = (b_pad // tile_b,)

    # Transposed (batch-on-lanes) input, zero-padded to the tile boundary.
    xT = jnp.pad(x.astype(jnp.float32).T, ((0, 0), (0, b_pad - B)))      # [3, b_pad]

    # Compile-time sinusoid tables (computed once in the wrapper).
    f = jnp.exp(-math.log(MAX_PERIOD) * jnp.arange(half, dtype=jnp.float32) / half)
    freqs32 = jnp.concatenate([f, f]).reshape(E, 1)
    phase32 = jnp.concatenate(
        [jnp.zeros((half,), jnp.float32),
         jnp.full((half,), -math.pi / 2.0, jnp.float32)]).reshape(E, 1)

    # Kernel-layout parameters (feature axis on sublanes, broadcast over lanes).
    w1t = w1.astype(jnp.float32).T.reshape(E, IN_DIM)     # [E, 2]
    b1c = b1.astype(jnp.float32).reshape(E, 1)
    w2c = w2.astype(jnp.float32).reshape(E, OUT_DIM)      # [E, 2]
    b2c = b2.astype(jnp.float32).reshape(OUT_DIM, 1)

    outT = pl.pallas_call(
        toynet_kernel,
        out_shape=jax.ShapeDtypeStruct((OUT_DIM, b_pad), jnp.float32),
        grid_spec=pltpu.PrefetchScalarGridSpec(
            num_scalar_prefetch=0,
            grid=grid,
            in_specs=[
                pl.BlockSpec((3, tile_b), lambda i: (0, i)),          # x tile
                pl.BlockSpec((E, 1), lambda i: (0, 0)),               # freqs (resident)
                pl.BlockSpec((E, 1), lambda i: (0, 0)),               # phase (resident)
                pl.BlockSpec((E, IN_DIM), lambda i: (0, 0)),          # w1^T  (resident)
                pl.BlockSpec((E, 1), lambda i: (0, 0)),               # b1    (resident)
                pl.BlockSpec((E, OUT_DIM), lambda i: (0, 0)),         # w2    (resident)
                pl.BlockSpec((OUT_DIM, 1), lambda i: (0, 0)),         # b2    (resident)
            ],
            out_specs=pl.BlockSpec((OUT_DIM, tile_b), lambda i: (0, i)),
        ),
        compiler_params=pltpu.CompilerParams(
            dimension_semantics=("parallel",),
            vmem_limit_bytes=32 * 1024 * 1024,   # safe on v5e/v6e/v7x, ample headroom
        ),
    )(xT, freqs32, phase32, w1t, b1c, w2c, b2c)

    return outT[:, :B].T                                               # [B, OUT_DIM]


def reference_forward(x, w1, b1, w2, b2):
    """Plain-JAX reference mirroring the PyTorch code."""
    half = EMBED_DIM // 2
    freqs = jnp.exp(-math.log(MAX_PERIOD) *
                    jnp.arange(half, dtype=jnp.float32) / half)
    args = x[:, 0:1] * freqs[None, :]
    z = jnp.concatenate([jnp.cos(args), jnp.sin(args)], axis=-1)
    h = jnp.maximum(x[:, 1:3] @ w1 + b1[None, :], 0.0) + z
    return h @ w2 + b2[None, :]


if __name__ == "__main__":
    key = jax.random.PRNGKey(0)
    k_x, k_w1, k_b1, k_w2, k_b2 = jax.random.split(key, 5)

    B = 8
    x = jax.random.normal(k_x, (B, 3), dtype=jnp.float32)
    # scale "timestep" column to a realistic range
    x = x.at[:, 0].set(jnp.abs(x[:, 0]) * 100.0)

    # Deterministic parameter init (PyTorch-Linear-like uniform bounds),
    # weights stored [in, out].
    bound1 = 1.0 / math.sqrt(IN_DIM)
    w1 = jax.random.uniform(k_w1, (IN_DIM, EMBED_DIM), jnp.float32, -bound1, bound1)
    b1 = jax.random.uniform(k_b1, (EMBED_DIM,), jnp.float32, -bound1, bound1)
    bound2 = 1.0 / math.sqrt(EMBED_DIM)
    w2 = jax.random.uniform(k_w2, (EMBED_DIM, OUT_DIM), jnp.float32, -bound2, bound2)
    b2 = jax.random.uniform(k_b2, (OUT_DIM,), jnp.float32, -bound2, bound2)

    out = toynet_forward(x, w1, b1, w2, b2)
    out = jax.block_until_ready(out)

    ref = reference_forward(x, w1, b1, w2, b2)
    assert out.shape == (B, OUT_DIM)
    # Slightly loose tolerance: sin(x)=cos(x-pi/2) phase trick differs from a
    # direct sin by ULP-scale range-reduction error at large timesteps.
    assert jnp.allclose(out, ref, atol=5e-4, rtol=5e-4), "mismatch vs reference"

    print("KERNEL_OK")
</pallas_src>

<mosaic_0001>
module attributes {stable_mosaic.version = 11 : i64} {
  func.func @toynet_kernel(%arg0: i32, %arg1: memref<3x128xf32, #tpu.memory_space<vmem>>, %arg2: memref<32x1xf32, #tpu.memory_space<vmem>>, %arg3: memref<32x1xf32, #tpu.memory_space<vmem>>, %arg4: memref<32x2xf32, #tpu.memory_space<vmem>>, %arg5: memref<32x1xf32, #tpu.memory_space<vmem>>, %arg6: memref<32x2xf32, #tpu.memory_space<vmem>>, %arg7: memref<2x1xf32, #tpu.memory_space<vmem>>, %arg8: memref<2x128xf32, #tpu.memory_space<vmem>>) attributes {dimension_semantics = [#tpu.dimension_semantics<parallel>], iteration_bounds = array<i64: 1>, scalar_prefetch = 0 : i64, scratch_operands = 0 : i64, tpu.core_type = #tpu.core_type<tc>, window_params = [{transform_indices = @transform_0, window_bounds = array<i64: 3, 128>}, {pipeline_mode = #tpu.pipeline_mode<synchronous>, transform_indices = @transform_1, window_bounds = array<i64: 32, 1>}, {pipeline_mode = #tpu.pipeline_mode<synchronous>, transform_indices = @transform_2, window_bounds = array<i64: 32, 1>}, {pipeline_mode = #tpu.pipeline_mode<synchronous>, transform_indices = @transform_3, window_bounds = array<i64: 32, 2>}, {pipeline_mode = #tpu.pipeline_mode<synchronous>, transform_indices = @transform_4, window_bounds = array<i64: 32, 1>}, {pipeline_mode = #tpu.pipeline_mode<synchronous>, transform_indices = @transform_5, window_bounds = array<i64: 32, 2>}, {pipeline_mode = #tpu.pipeline_mode<synchronous>, transform_indices = @transform_6, window_bounds = array<i64: 2, 1>}, {transform_indices = @transform_7, window_bounds = array<i64: 2, 128>}]} {
    %c0 = arith.constant 0 : index
    %c0_0 = arith.constant 0 : index
    %0 = vector.load %arg1[%c0, %c0_0] : memref<3x128xf32, #tpu.memory_space<vmem>>, vector<1x128xf32>
    %c1 = arith.constant 1 : index
    %c0_1 = arith.constant 0 : index
    %1 = vector.load %arg1[%c1, %c0_1] : memref<3x128xf32, #tpu.memory_space<vmem>>, vector<1x128xf32>
    %c2 = arith.constant 2 : index
    %c0_2 = arith.constant 0 : index
    %2 = vector.load %arg1[%c2, %c0_2] : memref<3x128xf32, #tpu.memory_space<vmem>>, vector<1x128xf32>
    %c0_3 = arith.constant 0 : index
    %c0_4 = arith.constant 0 : index
    %3 = vector.load %arg2[%c0_3, %c0_4] : memref<32x1xf32, #tpu.memory_space<vmem>>, vector<32x1xf32>
    %4 = vector.broadcast %0 : vector<1x128xf32> to vector<32x128xf32>
    %5 = vector.broadcast %3 : vector<32x1xf32> to vector<32x128xf32>
    %6 = arith.mulf %4, %5 : vector<32x128xf32>
    %c0_5 = arith.constant 0 : index
    %c0_6 = arith.constant 0 : index
    %7 = vector.load %arg3[%c0_5, %c0_6] : memref<32x1xf32, #tpu.memory_space<vmem>>, vector<32x1xf32>
    %8 = vector.broadcast %7 : vector<32x1xf32> to vector<32x128xf32>
    %9 = arith.addf %6, %8 : vector<32x128xf32>
    %10 = math.cos %9 : vector<32x128xf32>
    %c0_7 = arith.constant 0 : index
    %c0_8 = arith.constant 0 : index
    %11 = vector.load %arg4[%c0_7, %c0_8] : memref<32x2xf32, #tpu.memory_space<vmem>>, vector<32x1xf32>
    %12 = vector.broadcast %11 : vector<32x1xf32> to vector<32x128xf32>
    %13 = vector.broadcast %1 : vector<1x128xf32> to vector<32x128xf32>
    %14 = arith.mulf %12, %13 : vector<32x128xf32>
    %c0_9 = arith.constant 0 : index
    %c1_10 = arith.constant 1 : index
    %15 = vector.load %arg4[%c0_9, %c1_10] : memref<32x2xf32, #tpu.memory_space<vmem>>, vector<32x1xf32>
    %16 = vector.broadcast %15 : vector<32x1xf32> to vector<32x128xf32>
    %17 = vector.broadcast %2 : vector<1x128xf32> to vector<32x128xf32>
    %18 = arith.mulf %16, %17 : vector<32x128xf32>
    %19 = arith.addf %14, %18 : vector<32x128xf32>
    %c0_11 = arith.constant 0 : index
    %c0_12 = arith.constant 0 : index
    %20 = vector.load %arg5[%c0_11, %c0_12] : memref<32x1xf32, #tpu.memory_space<vmem>>, vector<32x1xf32>
    %21 = vector.broadcast %20 : vector<32x1xf32> to vector<32x128xf32>
    %22 = arith.addf %19, %21 : vector<32x128xf32>
    %cst = arith.constant 0.000000e+00 : f32
    %23 = vector.broadcast %cst : f32 to vector<32x128xf32>
    %24 = arith.maximumf %22, %23 : vector<32x128xf32>
    %25 = arith.addf %24, %10 : vector<32x128xf32>
    %c0_13 = arith.constant 0 : index
    %c0_14 = arith.constant 0 : index
    %26 = vector.load %arg6[%c0_13, %c0_14] : memref<32x2xf32, #tpu.memory_space<vmem>>, vector<32x1xf32>
    %27 = vector.broadcast %26 : vector<32x1xf32> to vector<32x128xf32>
    %28 = arith.mulf %25, %27 : vector<32x128xf32>
    %cst_15 = arith.constant dense<0.000000e+00> : vector<128xf32>
    %29 = vector.multi_reduction <add>, %28, %cst_15 [0] : vector<32x128xf32> to vector<128xf32>
    %30 = vector.shape_cast %29 : vector<128xf32> to vector<1x128xf32>
    %c0_16 = arith.constant 0 : index
    %c0_17 = arith.constant 0 : index
    %31 = vector.load %arg7[%c0_16, %c0_17] : memref<2x1xf32, #tpu.memory_space<vmem>>, vector<1x1xf32>
    %32 = vector.broadcast %31 : vector<1x1xf32> to vector<1x128xf32>
    %33 = arith.addf %30, %32 : vector<1x128xf32>
    %c0_18 = arith.constant 0 : index
    %c0_19 = arith.constant 0 : index
    %34 = vector.load %arg8[%c0_18, %c0_19] : memref<2x128xf32, #tpu.memory_space<vmem>>, vector<1x128xf32>
    tpu.vector_store %arg8[%c0_18, %c0_19], %33 {strides = array<i32>} : memref<2x128xf32, #tpu.memory_space<vmem>>, vector<1x128xf32>,
    %c0_20 = arith.constant 0 : index
    %c1_21 = arith.constant 1 : index
    %35 = vector.load %arg6[%c0_20, %c1_21] : memref<32x2xf32, #tpu.memory_space<vmem>>, vector<32x1xf32>
    %36 = vector.broadcast %35 : vector<32x1xf32> to vector<32x128xf32>
    %37 = arith.mulf %25, %36 : vector<32x128xf32>
    %cst_22 = arith.constant dense<0.000000e+00> : vector<128xf32>
    %38 = vector.multi_reduction <add>, %37, %cst_22 [0] : vector<32x128xf32> to vector<128xf32>
    %39 = vector.shape_cast %38 : vector<128xf32> to vector<1x128xf32>
    %c1_23 = arith.constant 1 : index
    %c0_24 = arith.constant 0 : index
    %40 = vector.load %arg7[%c1_23, %c0_24] : memref<2x1xf32, #tpu.memory_space<vmem>>, vector<1x1xf32>
    %41 = vector.broadcast %40 : vector<1x1xf32> to vector<1x128xf32>
    %42 = arith.addf %39, %41 : vector<1x128xf32>
    %c1_25 = arith.constant 1 : index
    %c0_26 = arith.constant 0 : index
    %43 = vector.load %arg8[%c1_25, %c0_26] : memref<2x128xf32, #tpu.memory_space<vmem>>, vector<1x128xf32>
    tpu.vector_store %arg8[%c1_25, %c0_26], %42 {strides = array<i32>} : memref<2x128xf32, #tpu.memory_space<vmem>>, vector<1x128xf32>,
    return
  }
  func.func @transform_0(%arg0: i32) -> (i32, i32) {
    %c0_i32 = arith.constant 0 : i32
    %c0_i32_0 = arith.constant 0 : i32
    return %c0_i32, %arg0 : i32, i32
  }
  func.func @transform_1(%arg0: i32) -> (i32, i32) {
    %c0_i32 = arith.constant 0 : i32
    %c0_i32_0 = arith.constant 0 : i32
    %c0_i32_1 = arith.constant 0 : i32
    return %c0_i32, %c0_i32_0 : i32, i32
  }
  func.func @transform_2(%arg0: i32) -> (i32, i32) {
    %c0_i32 = arith.constant 0 : i32
    %c0_i32_0 = arith.constant 0 : i32
    %c0_i32_1 = arith.constant 0 : i32
    return %c0_i32, %c0_i32_0 : i32, i32
  }
  func.func @transform_3(%arg0: i32) -> (i32, i32) {
    %c0_i32 = arith.constant 0 : i32
    %c0_i32_0 = arith.constant 0 : i32
    %c0_i32_1 = arith.constant 0 : i32
    return %c0_i32, %c0_i32_0 : i32, i32
  }
  func.func @transform_4(%arg0: i32) -> (i32, i32) {
    %c0_i32 = arith.constant 0 : i32
    %c0_i32_0 = arith.constant 0 : i32
    %c0_i32_1 = arith.constant 0 : i32
    return %c0_i32, %c0_i32_0 : i32, i32
  }
  func.func @transform_5(%arg0: i32) -> (i32, i32) {
    %c0_i32 = arith.constant 0 : i32
    %c0_i32_0 = arith.constant 0 : i32
    %c0_i32_1 = arith.constant 0 : i32
    return %c0_i32, %c0_i32_0 : i32, i32
  }
  func.func @transform_6(%arg0: i32) -> (i32, i32) {
    %c0_i32 = arith.constant 0 : i32
    %c0_i32_0 = arith.constant 0 : i32
    %c0_i32_1 = arith.constant 0 : i32
    return %c0_i32, %c0_i32_0 : i32, i32
  }
  func.func @transform_7(%arg0: i32) -> (i32, i32) {
    %c0_i32 = arith.constant 0 : i32
    %c0_i32_0 = arith.constant 0 : i32
    return %c0_i32, %arg0 : i32, i32
  }
}

</mosaic_0001>

<llo_original>
// kernel: tpu_custom_call.1
$region0: #{tpu_custom_call.1}
  #allocation0 [shape = 'u32[]', space=smem, size = 0x4, offset = 0x4, fixed_abs, tag = 'smem constant byte address 0x4 - core index']
  #allocation1 [shape = 'u32[144,128]{1,0:T(1,128)}', space=vmem, size = 0x12000, scoped, tag = 'internal scratch']
  %s0 = inlined_call_operand.vmem [shape: f32[3,128], index: 0, kind: input, shape index: {}]
  %s1 = inlined_call_operand.vmem [shape: f32[32,1], index: 1, kind: input, shape index: {}]
  %s2 = inlined_call_operand.vmem [shape: f32[32,1], index: 2, kind: input, shape index: {}]
  %s3 = inlined_call_operand.vmem [shape: f32[32,2], index: 3, kind: input, shape index: {}]
  %s4 = inlined_call_operand.vmem [shape: f32[32,1], index: 4, kind: input, shape index: {}]
  %s5 = inlined_call_operand.vmem [shape: f32[32,2], index: 5, kind: input, shape index: {}]
  %s6 = inlined_call_operand.vmem [shape: f32[2,1], index: 6, kind: input, shape index: {}]
  %s7 = inlined_call_operand.hbm [shape: f32[2,128], index: 7, kind: output, shape index: {}]
  %s8 = sld [smem:[#allocation0]]
  $region38: #{tpu_custom_call.1} parent=0
    _
  %s10 = ssub.s32 1, %s8
  %s11 = scalar_select 0, %s10, %s8
  $region1: #{tpu_custom_call.1} parent=0
    #allocation2 [shape = 'u8[1024]{0}', space=vmem, size = 0x400, scoped, tag = 'output window, operand 0, single buffered']
    #allocation3 [shape = 's32[1]{0}', space=sflag, size = 0x4, scoped, tag = 'scoped memory for tpu_custom_call.1']
    %12 = vsyncpa [#allocation3], 0
    // Predicated region
    $region2: #{tpu_custom_call.1} parent=1 // pred_check
      _
    $region3: #{tpu_custom_call.1} parent=1 // pred_check_branch
      %14 = sbr.rel (0) target = $region5
    $region4: #{tpu_custom_call.1} parent=1 // pred_region
      _
    $region5: #{tpu_custom_call.1} parent=1 // pred_fallthru
      _
    // Predicated region
    $region6: #{tpu_custom_call.1} parent=1 // pred_check
      _
    $region7: #{tpu_custom_call.1} parent=1 // pred_check_branch
      %16 = sbr.rel (0) target = $region9
    $region8: #{tpu_custom_call.1} parent=1 // pred_region
      _
    $region9: #{tpu_custom_call.1} parent=1 // pred_fallthru
      _
    // Predicated region
    $region10: #{tpu_custom_call.1} parent=1 // pred_check
      _
    $region11: #{tpu_custom_call.1} parent=1 // pred_check_branch
      %18 = sbr.rel (0) target = $region13
    $region12: #{tpu_custom_call.1} parent=1 // pred_region
      _
    $region13: #{tpu_custom_call.1} parent=1 // pred_fallthru
      _
    // Predicated region
    $region14: #{tpu_custom_call.1} parent=1 // pred_check
      _
    $region15: #{tpu_custom_call.1} parent=1 // pred_check_branch
      %20 = sbr.rel (0) target = $region17
    $region16: #{tpu_custom_call.1} parent=1 // pred_region
      _
    $region17: #{tpu_custom_call.1} parent=1 // pred_fallthru
      _
    // Predicated region
    $region18: #{tpu_custom_call.1} parent=1 // pred_check
      _
    $region19: #{tpu_custom_call.1} parent=1 // pred_check_branch
      %22 = sbr.rel (0) target = $region21
    $region20: #{tpu_custom_call.1} parent=1 // pred_region
      _
    $region21: #{tpu_custom_call.1} parent=1 // pred_fallthru
      _
    // Predicated region
    $region22: #{tpu_custom_call.1} parent=1 // pred_check
      _
    $region23: #{tpu_custom_call.1} parent=1 // pred_check_branch
      %24 = sbr.rel (0) target = $region25
    $region24: #{tpu_custom_call.1} parent=1 // pred_region
      _
    $region25: #{tpu_custom_call.1} parent=1 // pred_fallthru
      _
    // Predicated region
    $region26: #{tpu_custom_call.1} parent=1 // pred_check
      _
    $region27: #{tpu_custom_call.1} parent=1 // pred_check_branch
      %26 = sbr.rel (0) target = $region29
    $region28: #{tpu_custom_call.1} parent=1 // pred_region
      _
    $region29: #{tpu_custom_call.1} parent=1 // pred_fallthru
      _
    %v27 = vld [vmem:[%s0] sm:$0x1]
    %v28 = vld [vmem:[%s0 + $0x1] sm:$0x1]
    %v29 = vld [vmem:[%s0 + $0x2] sm:$0x1]
    %v30 = vld [vmem:[%s1] sm:$0xff]
    %v31 = vld [vmem:[%s1 + $0x8] sm:$0xff]
    %v32 = vld [vmem:[%s1 + $0x10] sm:$0xff]
    %v33 = vld [vmem:[%s1 + $0x18] sm:$0xff]
    %v34 = vlaneseq
    %v35 = vshrl.u32 %v34, 7
    %v36 = vsub.s32 0, %v35
    %v37 = vrot.slane %v27, %v36
    %39 = vset.pattern.permute.xlu0 0
    %40 = vperm.xlu0 %39, %v30
    %v41 = vpop.permute.xlu0 %40
    %44 = vset.pattern.permute.xlu0 0
    %45 = vperm.xlu0 %44, %v31
    %v46 = vpop.permute.xlu0 %45
    %49 = vset.pattern.permute.xlu0 0
    %50 = vperm.xlu0 %49, %v32
    %v51 = vpop.permute.xlu0 %50
    %54 = vset.pattern.permute.xlu0 0
    %55 = vperm.xlu0 %54, %v33
    %v56 = vpop.permute.xlu0 %55
    %v58 = vmul.f32 %v37, %v41
    %v59 = vmul.f32 %v37, %v46
    %v60 = vmul.f32 %v37, %v51
    %v61 = vmul.f32 %v37, %v56
    %v62 = vld [vmem:[%s2] sm:$0xff]
    %v63 = vld [vmem:[%s2 + $0x8] sm:$0xff]
    %v64 = vld [vmem:[%s2 + $0x10] sm:$0xff]
    %v65 = vld [vmem:[%s2 + $0x18] sm:$0xff]
    %67 = vset.pattern.permute.xlu0 0
    %68 = vperm.xlu0 %67, %v62
    %v69 = vpop.permute.xlu0 %68
    %72 = vset.pattern.permute.xlu0 0
    %73 = vperm.xlu0 %72, %v63
    %v74 = vpop.permute.xlu0 %73
    %77 = vset.pattern.permute.xlu0 0
    %78 = vperm.xlu0 %77, %v64
    %v79 = vpop.permute.xlu0 %78
    %82 = vset.pattern.permute.xlu0 0
    %83 = vperm.xlu0 %82, %v65
    %v84 = vpop.permute.xlu0 %83
    %v86 = vadd.f32 %v58, %v69
    %v87 = vadd.f32 %v59, %v74
    %v88 = vadd.f32 %v60, %v79
    %v89 = vadd.f32 %v61, %v84
    %v90 = vand.u32 2147483647, %v86
    %vm91 = vcmp.le.f32.partialorder %v90, 0.7853982
    %vm92 = vcmp.lt.s32.totalorder %v86, 0
    %v93 = vand.u32 %v86, 2139095040
    %v94 = vshrl.u32 %v93, 23
    %v95 = vsub.s32 %v94, 127
    %v96 = vand.u32 2147483647, %v86
    %v97 = vand.u32 %v96, 8388607
    %v98 = vor.u32 %v97, 8388608
    %v99 = vsub.s32 0, %v98
    %v100 = vadd.s32 %v95, 1
    %vm101 = vcmp.gt.s32.totalorder %v100, 0
    %v102 = vsel %vm101, %v100, 0
    %v103 = vshrl.u32 %v102, 5
    %v104 = vand.u32 %v102, 31
    %v105 = vsub.s32 32, %v104
    %v106 = vshrl.u32 683565275, %v105
    %v107 = vshll.u32 683565275, %v104
    %v108 = vshrl.u32 2475754826, %v105
    %v109 = vor.u32 %v107, %v108
    %v110 = vshll.u32 2475754826, %v104
    %v111 = vshrl.u32 2131351028, %v105
    %v112 = vor.u32 %v110, %v111
    %v113 = vshll.u32 2131351028, %v104
    %v114 = vshrl.u32 2102212464, %v105
    %v115 = vor.u32 %v113, %v114
    %v116 = vshll.u32 2102212464, %v104
    %v117 = vshrl.u32 920167782, %v105
    %v118 = vor.u32 %v116, %v117
    %v119 = vshll.u32 920167782, %v104
    %v120 = vshrl.u32 1326507024, %v105
    %v121 = vor.u32 %v119, %v120
    %vm122 = vcmp.lt.s32.totalorder %v103, 1
    %vm123 = vcmp.lt.s32.totalorder %v103, 2
    %vm124 = vcmp.lt.s32.totalorder %v103, 3
    %vm125 = vcmp.lt.s32.totalorder %v103, 4
    %v126 = vsel %vm122, %v106, %v109
    %v127 = vsel %vm125, %v115, 2102212464
    %v128 = vsel %vm124, %v112, %v127
    %v129 = vsel %vm123, %v126, %v128
    %v130 = vsel %vm122, %v109, %v112
    %v131 = vsel %vm125, %v118, 920167782
    %v132 = vsel %vm124, %v115, %v131
    %v133 = vsel %vm123, %v130, %v132
    %v134 = vsel %vm122, %v112, %v115
    %v135 = vsel %vm125, %v121, 1326507024
    %v136 = vsel %vm124, %v118, %v135
    %v137 = vsel %vm123, %v134, %v136
    %v138 = vshll.u32 %v98, 8
    %v139 = vmul.u32.u64.compose %v138, %v137
    %v140 = vextract.low.u32 %v139
    %v141 = vextract.high.u32 %v139
    %v142 = vmul.u32.u64.compose %v138, %v133
    %v143 = vextract.low.u32 %v142
    %v144 = vextract.high.u32 %v142
    %v145 = vmul.u32 %v138, %v129
    %v146 = vadd.s32 %v141, %v143
    %vm147 = vc.u32 %v141, %v143
    %v148 = vadd.s32 %v144, 1
    %v149 = vsel %vm147, %v148, %v144
    %v150 = vadd.s32 %v145, %v149
    %v151 = vadd.s32 %v150, 536870912
    %v152 = vshrl.u32 %v151, 30
    %v153 = vshll.u32 %v152, 30
    %v154 = vsub.s32 %v150, %v153
    %vm155 = vcmp.lt.s32.totalorder %v154, 0
    %v156 = vsub.s32 0, %v154
    %v157 = vsel %vm155, %v156, %v154
    %v158 = vclz %v157
    %v159 = vsub.s32 %v158, 2
    %vm160 = vcmp.gt.s32.totalorder 0, %v159
    %v161 = vsel %vm160, 0, %v159
    %v162 = vsub.s32 32, %v161
    %v163 = vshll.u32 %v154, %v161
    %v164 = vshrl.u32 %v146, %v162
    %v165 = vor.u32 %v163, %v164
    %v166 = vsub.s32 4294967266, %v161
    %v167 = vadd.s32 %v166, 127
    %v168 = vshll.u32 %v167, 23
    %v169 = vor.u32 4788187, %v168
    %v170 = vand.u32 2147483647, %v169
    %v172 = vcvt.s32.f32 %v165
    %v173 = vmul.f32 %v172, %v170
    %v174 = vxor.u32 %v173, 2147483648
    %v175 = vsel %vm92, %v174, %v173
    %v176 = vsub.s32 4, %v152
    %v177 = vsel %vm92, %v176, %v152
    %v178 = vsel %vm91, %v86, %v175
    %v179 = vsel %vm91, 0, %v177
    %v180 = vcosq.f32.pop %v178
    %v181 = vsinq.f32.pop %v178
    %vm182 = vweird.f32 %v86
    %v183 = vand.u32 %v179, 3
    %vm184 = vcmp.lt.s32.totalorder %v183, 2
    %vm185 = vcmp.eq.s32.totalorder %v183, 0
    %v186 = vxor.u32 %v181, 2147483648
    %v187 = vsel %vm185, %v180, %v186
    %vm188 = vcmp.eq.s32.totalorder %v183, 2
    %v189 = vxor.u32 %v180, 2147483648
    %v190 = vsel %vm188, %v189, %v181
    %v191 = vsel %vm184, %v187, %v190
    %v192 = vsel %vm182, nan, %v191
    %v193 = vand.u32 2147483647, %v87
    %vm194 = vcmp.le.f32.partialorder %v193, 0.7853982
    %vm195 = vcmp.lt.s32.totalorder %v87, 0
    %v196 = vand.u32 %v87, 2139095040
    %v197 = vshrl.u32 %v196, 23
    %v198 = vsub.s32 %v197, 127
    %v199 = vand.u32 2147483647, %v87
    %v200 = vand.u32 %v199, 8388607
    %v201 = vor.u32 %v200, 8388608
    %v202 = vsub.s32 0, %v201
    %v203 = vadd.s32 %v198, 1
    %vm204 = vcmp.gt.s32.totalorder %v203, 0
    %v205 = vsel %vm204, %v203, 0
    %v206 = vshrl.u32 %v205, 5
    %v207 = vand.u32 %v205, 31
    %v208 = vsub.s32 32, %v207
    %v209 = vshrl.u32 683565275, %v208
    %v210 = vshll.u32 683565275, %v207
    %v211 = vshrl.u32 2475754826, %v208
    %v212 = vor.u32 %v210, %v211
    %v213 = vshll.u32 2475754826, %v207
    %v214 = vshrl.u32 2131351028, %v208
    %v215 = vor.u32 %v213, %v214
    %v216 = vshll.u32 2131351028, %v207
    %v217 = vshrl.u32 2102212464, %v208
    %v218 = vor.u32 %v216, %v217
    %v219 = vshll.u32 2102212464, %v207
    %v220 = vshrl.u32 920167782, %v208
    %v221 = vor.u32 %v219, %v220
    %v222 = vshll.u32 920167782, %v207
    %v223 = vshrl.u32 1326507024, %v208
    %v224 = vor.u32 %v222, %v223
    %vm225 = vcmp.lt.s32.totalorder %v206, 1
    %vm226 = vcmp.lt.s32.totalorder %v206, 2
    %vm227 = vcmp.lt.s32.totalorder %v206, 3
    %vm228 = vcmp.lt.s32.totalorder %v206, 4
    %v229 = vsel %vm225, %v209, %v212
    %v230 = vsel %vm228, %v218, 2102212464
    %v231 = vsel %vm227, %v215, %v230
    %v232 = vsel %vm226, %v229, %v231
    %v233 = vsel %vm225, %v212, %v215
    %v234 = vsel %vm228, %v221, 920167782
    %v235 = vsel %vm227, %v218, %v234
    %v236 = vsel %vm226, %v233, %v235
    %v237 = vsel %vm225, %v215, %v218
    %v238 = vsel %vm228, %v224, 1326507024
    %v239 = vsel %vm227, %v221, %v238
    %v240 = vsel %vm226, %v237, %v239
    %v241 = vshll.u32 %v201, 8
    %v242 = vmul.u32.u64.compose %v241, %v240
    %v243 = vextract.low.u32 %v242
    %v244 = vextract.high.u32 %v242
    %v245 = vmul.u32.u64.compose %v241, %v236
    %v246 = vextract.low.u32 %v245
    %v247 = vextract.high.u32 %v245
    %v248 = vmul.u32 %v241, %v232
    %v249 = vadd.s32 %v244, %v246
    %vm250 = vc.u32 %v244, %v246
    %v251 = vadd.s32 %v247, 1
    %v252 = vsel %vm250, %v251, %v247
    %v253 = vadd.s32 %v248, %v252
    %v254 = vadd.s32 %v253, 536870912
    %v255 = vshrl.u32 %v254, 30
    %v256 = vshll.u32 %v255, 30
    %v257 = vsub.s32 %v253, %v256
    %vm258 = vcmp.lt.s32.totalorder %v257, 0
    %v259 = vsub.s32 0, %v257
    %v260 = vsel %vm258, %v259, %v257
    %v261 = vclz %v260
    %v262 = vsub.s32 %v261, 2
    %vm263 = vcmp.gt.s32.totalorder 0, %v262
    %v264 = vsel %vm263, 0, %v262
    %v265 = vsub.s32 32, %v264
    %v266 = vshll.u32 %v257, %v264
    %v267 = vshrl.u32 %v249, %v265
    %v268 = vor.u32 %v266, %v267
    %v269 = vsub.s32 4294967266, %v264
    %v270 = vadd.s32 %v269, 127
    %v271 = vshll.u32 %v270, 23
    %v272 = vor.u32 4788187, %v271
    %v273 = vand.u32 2147483647, %v272
    %v275 = vcvt.s32.f32 %v268
    %v276 = vmul.f32 %v275, %v273
    %v277 = vxor.u32 %v276, 2147483648
    %v278 = vsel %vm195, %v277, %v276
    %v279 = vsub.s32 4, %v255
    %v280 = vsel %vm195, %v279, %v255
    %v281 = vsel %vm194, %v87, %v278
    %v282 = vsel %vm194, 0, %v280
    %v283 = vcosq.f32.pop %v281
    %v284 = vsinq.f32.pop %v281
    %vm285 = vweird.f32 %v87
    %v286 = vand.u32 %v282, 3
    %vm287 = vcmp.lt.s32.totalorder %v286, 2
    %vm288 = vcmp.eq.s32.totalorder %v286, 0
    %v289 = vxor.u32 %v284, 2147483648
    %v290 = vsel %vm288, %v283, %v289
    %vm291 = vcmp.eq.s32.totalorder %v286, 2
    %v292 = vxor.u32 %v283, 2147483648
    %v293 = vsel %vm291, %v292, %v284
    %v294 = vsel %vm287, %v290, %v293
    %v295 = vsel %vm285, nan, %v294
    %v296 = vand.u32 2147483647, %v88
    %vm297 = vcmp.le.f32.partialorder %v296, 0.7853982
    %vm298 = vcmp.lt.s32.totalorder %v88, 0
    %v299 = vand.u32 %v88, 2139095040
    %v300 = vshrl.u32 %v299, 23
    %v301 = vsub.s32 %v300, 127
    %v302 = vand.u32 2147483647, %v88
    %v303 = vand.u32 %v302, 8388607
    %v304 = vor.u32 %v303, 8388608
    %v305 = vsub.s32 0, %v304
    %v306 = vadd.s32 %v301, 1
    %vm307 = vcmp.gt.s32.totalorder %v306, 0
    %v308 = vsel %vm307, %v306, 0
    %v309 = vshrl.u32 %v308, 5
    %v310 = vand.u32 %v308, 31
    %v311 = vsub.s32 32, %v310
    %v312 = vshrl.u32 683565275, %v311
    %v313 = vshll.u32 683565275, %v310
    %v314 = vshrl.u32 2475754826, %v311
    %v315 = vor.u32 %v313, %v314
    %v316 = vshll.u32 2475754826, %v310
    %v317 = vshrl.u32 2131351028, %v311
    %v318 = vor.u32 %v316, %v317
    %v319 = vshll.u32 2131351028, %v310
    %v320 = vshrl.u32 2102212464, %v311
    %v321 = vor.u32 %v319, %v320
    %v322 = vshll.u32 2102212464, %v310
    %v323 = vshrl.u32 920167782, %v311
    %v324 = vor.u32 %v322, %v323
    %v325 = vshll.u32 920167782, %v310
    %v326 = vshrl.u32 1326507024, %v311
    %v327 = vor.u32 %v325, %v326
    %vm328 = vcmp.lt.s32.totalorder %v309, 1
    %vm329 = vcmp.lt.s32.totalorder %v309, 2
    %vm330 = vcmp.lt.s32.totalorder %v309, 3
    %vm331 = vcmp.lt.s32.totalorder %v309, 4
    %v332 = vsel %vm328, %v312, %v315
    %v333 = vsel %vm331, %v321, 2102212464
    %v334 = vsel %vm330, %v318, %v333
    %v335 = vsel %vm329, %v332, %v334
    %v336 = vsel %vm328, %v315, %v318
    %v337 = vsel %vm331, %v324, 920167782
    %v338 = vsel %vm330, %v321, %v337
    %v339 = vsel %vm329, %v336, %v338
    %v340 = vsel %vm328, %v318, %v321
    %v341 = vsel %vm331, %v327, 1326507024
    %v342 = vsel %vm330, %v324, %v341
    %v343 = vsel %vm329, %v340, %v342
    %v344 = vshll.u32 %v304, 8
    %v345 = vmul.u32.u64.compose %v344, %v343
    %v346 = vextract.low.u32 %v345
    %v347 = vextract.high.u32 %v345
    %v348 = vmul.u32.u64.compose %v344, %v339
    %v349 = vextract.low.u32 %v348
    %v350 = vextract.high.u32 %v348
    %v351 = vmul.u32 %v344, %v335
    %v352 = vadd.s32 %v347, %v349
    %vm353 = vc.u32 %v347, %v349
    %v354 = vadd.s32 %v350, 1
    %v355 = vsel %vm353, %v354, %v350
    %v356 = vadd.s32 %v351, %v355
    %v357 = vadd.s32 %v356, 536870912
    %v358 = vshrl.u32 %v357, 30
    %v359 = vshll.u32 %v358, 30
    %v360 = vsub.s32 %v356, %v359
    %vm361 = vcmp.lt.s32.totalorder %v360, 0
    %v362 = vsub.s32 0, %v360
    %v363 = vsel %vm361, %v362, %v360
    %v364 = vclz %v363
    %v365 = vsub.s32 %v364, 2
    %vm366 = vcmp.gt.s32.totalorder 0, %v365
    %v367 = vsel %vm366, 0, %v365
    %v368 = vsub.s32 32, %v367
    %v369 = vshll.u32 %v360, %v367
    %v370 = vshrl.u32 %v352, %v368
    %v371 = vor.u32 %v369, %v370
    %v372 = vsub.s32 4294967266, %v367
    %v373 = vadd.s32 %v372, 127
    %v374 = vshll.u32 %v373, 23
    %v375 = vor.u32 4788187, %v374
    %v376 = vand.u32 2147483647, %v375
    %v378 = vcvt.s32.f32 %v371
    %v379 = vmul.f32 %v378, %v376
    %v380 = vxor.u32 %v379, 2147483648
    %v381 = vsel %vm298, %v380, %v379
    %v382 = vsub.s32 4, %v358
    %v383 = vsel %vm298, %v382, %v358
    %v384 = vsel %vm297, %v88, %v381
    %v385 = vsel %vm297, 0, %v383
    %v386 = vcosq.f32.pop %v384
    %v387 = vsinq.f32.pop %v384
    %vm388 = vweird.f32 %v88
    %v389 = vand.u32 %v385, 3
    %vm390 = vcmp.lt.s32.totalorder %v389, 2
    %vm391 = vcmp.eq.s32.totalorder %v389, 0
    %v392 = vxor.u32 %v387, 2147483648
    %v393 = vsel %vm391, %v386, %v392
    %vm394 = vcmp.eq.s32.totalorder %v389, 2
    %v395 = vxor.u32 %v386, 2147483648
    %v396 = vsel %vm394, %v395, %v387
    %v397 = vsel %vm390, %v393, %v396
    %v398 = vsel %vm388, nan, %v397
    %v399 = vand.u32 2147483647, %v89
    %vm400 = vcmp.le.f32.partialorder %v399, 0.7853982
    %vm401 = vcmp.lt.s32.totalorder %v89, 0
    %v402 = vand.u32 %v89, 2139095040
    %v403 = vshrl.u32 %v402, 23
    %v404 = vsub.s32 %v403, 127
    %v405 = vand.u32 2147483647, %v89
    %v406 = vand.u32 %v405, 8388607
    %v407 = vor.u32 %v406, 8388608
    %v408 = vsub.s32 0, %v407
    %v409 = vadd.s32 %v404, 1
    %vm410 = vcmp.gt.s32.totalorder %v409, 0
    %v411 = vsel %vm410, %v409, 0
    %v412 = vshrl.u32 %v411, 5
    %v413 = vand.u32 %v411, 31
    %v414 = vsub.s32 32, %v413
    %v415 = vshrl.u32 683565275, %v414
    %v416 = vshll.u32 683565275, %v413
    %v417 = vshrl.u32 2475754826, %v414
    %v418 = vor.u32 %v416, %v417
    %v419 = vshll.u32 2475754826, %v413
    %v420 = vshrl.u32 2131351028, %v414
    %v421 = vor.u32 %v419, %v420
    %v422 = vshll.u32 2131351028, %v413
    %v423 = vshrl.u32 2102212464, %v414
    %v424 = vor.u32 %v422, %v423
    %v425 = vshll.u32 2102212464, %v413
    %v426 = vshrl.u32 920167782, %v414
    %v427 = vor.u32 %v425, %v426
    %v428 = vshll.u32 920167782, %v413
    %v429 = vshrl.u32 1326507024, %v414
    %v430 = vor.u32 %v428, %v429
    %vm431 = vcmp.lt.s32.totalorder %v412, 1
    %vm432 = vcmp.lt.s32.totalorder %v412, 2
    %vm433 = vcmp.lt.s32.totalorder %v412, 3
    %vm434 = vcmp.lt.s32.totalorder %v412, 4
    %v435 = vsel %vm431, %v415, %v418
    %v436 = vsel %vm434, %v424, 2102212464
    %v437 = vsel %vm433, %v421, %v436
    %v438 = vsel %vm432, %v435, %v437
    %v439 = vsel %vm431, %v418, %v421
    %v440 = vsel %vm434, %v427, 920167782
    %v441 = vsel %vm433, %v424, %v440
    %v442 = vsel %vm432, %v439, %v441
    %v443 = vsel %vm431, %v421, %v424
    %v444 = vsel %vm434, %v430, 1326507024
    %v445 = vsel %vm433, %v427, %v444
    %v446 = vsel %vm432, %v443, %v445
    %v447 = vshll.u32 %v407, 8
    %v448 = vmul.u32.u64.compose %v447, %v446
    %v449 = vextract.low.u32 %v448
    %v450 = vextract.high.u32 %v448
    %v451 = vmul.u32.u64.compose %v447, %v442
    %v452 = vextract.low.u32 %v451
    %v453 = vextract.high.u32 %v451
    %v454 = vmul.u32 %v447, %v438
    %v455 = vadd.s32 %v450, %v452
    %vm456 = vc.u32 %v450, %v452
    %v457 = vadd.s32 %v453, 1
    %v458 = vsel %vm456, %v457, %v453
    %v459 = vadd.s32 %v454, %v458
    %v460 = vadd.s32 %v459, 536870912
    %v461 = vshrl.u32 %v460, 30
    %v462 = vshll.u32 %v461, 30
    %v463 = vsub.s32 %v459, %v462
    %vm464 = vcmp.lt.s32.totalorder %v463, 0
    %v465 = vsub.s32 0, %v463
    %v466 = vsel %vm464, %v465, %v463
    %v467 = vclz %v466
    %v468 = vsub.s32 %v467, 2
    %vm469 = vcmp.gt.s32.totalorder 0, %v468
    %v470 = vsel %vm469, 0, %v468
    %v471 = vsub.s32 32, %v470
    %v472 = vshll.u32 %v463, %v470
    %v473 = vshrl.u32 %v455, %v471
    %v474 = vor.u32 %v472, %v473
    %v475 = vsub.s32 4294967266, %v470
    %v476 = vadd.s32 %v475, 127
    %v477 = vshll.u32 %v476, 23
    %v478 = vor.u32 4788187, %v477
    %v479 = vand.u32 2147483647, %v478
    %v481 = vcvt.s32.f32 %v474
    %v482 = vmul.f32 %v481, %v479
    %v483 = vxor.u32 %v482, 2147483648
    %v484 = vsel %vm401, %v483, %v482
    %v485 = vsub.s32 4, %v461
    %v486 = vsel %vm401, %v485, %v461
    %v487 = vsel %vm400, %v89, %v484
    %v488 = vsel %vm400, 0, %v486
    %v489 = vcosq.f32.pop %v487
    %v490 = vsinq.f32.pop %v487
    %vm491 = vweird.f32 %v89
    %v492 = vand.u32 %v488, 3
    %vm493 = vcmp.lt.s32.totalorder %v492, 2
    %vm494 = vcmp.eq.s32.totalorder %v492, 0
    %v495 = vxor.u32 %v490, 2147483648
    %v496 = vsel %vm494, %v489, %v495
    %vm497 = vcmp.eq.s32.totalorder %v492, 2
    %v498 = vxor.u32 %v489, 2147483648
    %v499 = vsel %vm497, %v498, %v490
    %v500 = vsel %vm493, %v496, %v499
    %v501 = vsel %vm491, nan, %v500
    %v502 = vld [vmem:[%s3] sm:$0xff]
    %v503 = vld [vmem:[%s3 + $0x8] sm:$0xff]
    %v504 = vld [vmem:[%s3 + $0x10] sm:$0xff]
    %v505 = vld [vmem:[%s3 + $0x18] sm:$0xff]
    %507 = vset.pattern.permute.xlu0 0
    %508 = vperm.xlu0 %507, %v502
    %v509 = vpop.permute.xlu0 %508
    %512 = vset.pattern.permute.xlu0 0
    %513 = vperm.xlu0 %512, %v503
    %v514 = vpop.permute.xlu0 %513
    %517 = vset.pattern.permute.xlu0 0
    %518 = vperm.xlu0 %517, %v504
    %v519 = vpop.permute.xlu0 %518
    %522 = vset.pattern.permute.xlu0 0
    %523 = vperm.xlu0 %522, %v505
    %v524 = vpop.permute.xlu0 %523
    %v526 = vlaneseq
    %v527 = vshrl.u32 %v526, 7
    %v528 = vsub.s32 0, %v527
    %v529 = vrot.slane %v28, %v528
    %v530 = vmul.f32 %v509, %v529
    %v531 = vmul.f32 %v514, %v529
    %v532 = vmul.f32 %v519, %v529
    %v533 = vmul.f32 %v524, %v529
    %534 = vset.pattern.permute.xlu0 1
    %535 = vperm.xlu0 %534, %v502
    %v536 = vpop.permute.xlu0 %535
    %538 = vset.pattern.permute.xlu0 1
    %539 = vperm.xlu0 %538, %v503
    %v540 = vpop.permute.xlu0 %539
    %542 = vset.pattern.permute.xlu0 1
    %543 = vperm.xlu0 %542, %v504
    %v544 = vpop.permute.xlu0 %543
    %546 = vset.pattern.permute.xlu0 1
    %547 = vperm.xlu0 %546, %v505
    %v548 = vpop.permute.xlu0 %547
    %v550 = vlaneseq
    %v551 = vshrl.u32 %v550, 7
    %v552 = vsub.s32 0, %v551
    %v553 = vrot.slane %v29, %v552
    %v554 = vmul.f32 %v536, %v553
    %v555 = vmul.f32 %v540, %v553
    %v556 = vmul.f32 %v544, %v553
    %v557 = vmul.f32 %v548, %v553
    %v558 = vadd.f32 %v530, %v554
    %v559 = vadd.f32 %v531, %v555
    %v560 = vadd.f32 %v532, %v556
    %v561 = vadd.f32 %v533, %v557
    %v562 = vld [vmem:[%s4] sm:$0xff]
    %v563 = vld [vmem:[%s4 + $0x8] sm:$0xff]
    %v564 = vld [vmem:[%s4 + $0x10] sm:$0xff]
    %v565 = vld [vmem:[%s4 + $0x18] sm:$0xff]
    %567 = vset.pattern.permute.xlu0 0
    %568 = vperm.xlu0 %567, %v562
    %v569 = vpop.permute.xlu0 %568
    %572 = vset.pattern.permute.xlu0 0
    %573 = vperm.xlu0 %572, %v563
    %v574 = vpop.permute.xlu0 %573
    %577 = vset.pattern.permute.xlu0 0
    %578 = vperm.xlu0 %577, %v564
    %v579 = vpop.permute.xlu0 %578
    %582 = vset.pattern.permute.xlu0 0
    %583 = vperm.xlu0 %582, %v565
    %v584 = vpop.permute.xlu0 %583
    %v586 = vadd.f32 %v558, %v569
    %v587 = vadd.f32 %v559, %v574
    %v588 = vadd.f32 %v560, %v579
    %v589 = vadd.f32 %v561, %v584
    %v590 = vmax.f32 %v586, 0.0
    %v591 = vmax.f32 %v587, 0.0
    %v592 = vmax.f32 %v588, 0.0
    %v593 = vmax.f32 %v589, 0.0
    %v594 = vadd.f32 %v590, %v192
    %v595 = vadd.f32 %v591, %v295
    %v596 = vadd.f32 %v592, %v398
    %v597 = vadd.f32 %v593, %v501
    %v598 = vld [vmem:[%s5] sm:$0xff]
    %v599 = vld [vmem:[%s5 + $0x8] sm:$0xff]
    %v600 = vld [vmem:[%s5 + $0x10] sm:$0xff]
    %v601 = vld [vmem:[%s5 + $0x18] sm:$0xff]
    %603 = vset.pattern.permute.xlu0 0
    %604 = vperm.xlu0 %603, %v598
    %v605 = vpop.permute.xlu0 %604
    %608 = vset.pattern.permute.xlu0 0
    %609 = vperm.xlu0 %608, %v599
    %v610 = vpop.permute.xlu0 %609
    %613 = vset.pattern.permute.xlu0 0
    %614 = vperm.xlu0 %613, %v600
    %v615 = vpop.permute.xlu0 %614
    %618 = vset.pattern.permute.xlu0 0
    %619 = vperm.xlu0 %618, %v601
    %v620 = vpop.permute.xlu0 %619
    %v622 = vmul.f32 %v594, %v605
    %v623 = vmul.f32 %v595, %v610
    %v624 = vmul.f32 %v596, %v615
    %v625 = vmul.f32 %v597, %v620
    %v626 = vadd.f32 %v622, %v623
    %v627 = vadd.f32 %v626, %v624
    %v628 = vadd.f32 %v627, %v625
    %v629 = vrot.slane %v628, 4
    %v630 = vadd.f32 %v628, %v629
    %v631 = vrot.slane %v630, 2
    %v632 = vadd.f32 %v630, %v631
    %v633 = vrot.slane %v632, 1
    %v634 = vadd.f32 %v632, %v633
    %v635 = vld [vmem:[%s6] sm:$0x1]
    %637 = vset.pattern.permute.xlu0 0
    %638 = vperm.xlu0 %637, %v635
    %v639 = vpop.permute.xlu0 %638
    %v641 = vadd.f32 %v634, %v639
    %642 = vst [vmem:[#allocation2] sm:$0x1] %v641
    %v643 = vld [vmem:[%s5] sm:$0xff]
    %v644 = vld [vmem:[%s5 + $0x8] sm:$0xff]
    %v645 = vld [vmem:[%s5 + $0x10] sm:$0xff]
    %v646 = vld [vmem:[%s5 + $0x18] sm:$0xff]
    %648 = vset.pattern.permute.xlu0 1
    %649 = vperm.xlu0 %648, %v643
    %v650 = vpop.permute.xlu0 %649
    %653 = vset.pattern.permute.xlu0 1
    %654 = vperm.xlu0 %653, %v644
    %v655 = vpop.permute.xlu0 %654
    %658 = vset.pattern.permute.xlu0 1
    %659 = vperm.xlu0 %658, %v645
    %v660 = vpop.permute.xlu0 %659
    %663 = vset.pattern.permute.xlu0 1
    %664 = vperm.xlu0 %663, %v646
    %v665 = vpop.permute.xlu0 %664
    %v667 = vmul.f32 %v594, %v650
    %v668 = vmul.f32 %v595, %v655
    %v669 = vmul.f32 %v596, %v660
    %v670 = vmul.f32 %v597, %v665
    %v671 = vadd.f32 %v667, %v668
    %v672 = vadd.f32 %v671, %v669
    %v673 = vadd.f32 %v672, %v670
    %v674 = vrot.slane %v673, 4
    %v675 = vadd.f32 %v673, %v674
    %v676 = vrot.slane %v675, 2
    %v677 = vadd.f32 %v675, %v676
    %v678 = vrot.slane %v677, 1
    %v679 = vadd.f32 %v677, %v678
    %v680 = vld [vmem:[%s6 + $0x1] sm:$0x1]
    %682 = vset.pattern.permute.xlu0 0
    %683 = vperm.xlu0 %682, %v680
    %v684 = vpop.permute.xlu0 %683
    %v686 = vadd.f32 %v679, %v684
    %687 = vst [vmem:[#allocation2 + $0x1] sm:$0x1] %v686
    // Predicated region
    $region30: #{tpu_custom_call.1} parent=1 // pred_check
      _
    $region31: #{tpu_custom_call.1} parent=1 // pred_check_branch
      %689 = sbr.rel (0) target = $region33
    $region32: #{tpu_custom_call.1} parent=1 // pred_region
      %s691 = ssub.s32 32, 32
      %692 = vsyncadd [#allocation3], %s691
      %s694 = sshll.u32 [#allocation2], 4
      %s695 = int_to_ptr.vmem [resolvable:$true] %s694
      %697 = dma.vmem_to_hbm [thread:$0]  %s695, 32, %s7, [#allocation3]
    $region33: #{tpu_custom_call.1} parent=1 // pred_fallthru
      _
    // Predicated region
    $region34: #{tpu_custom_call.1} parent=1 // pred_check
      _
    $region35: #{tpu_custom_call.1} parent=1 // pred_check_branch
      %699 = sbr.rel (0) target = $region37
    $region36: #{tpu_custom_call.1} parent=1 // pred_region
      %700 = dma.done [#allocation3], 32
    $region37: #{tpu_custom_call.1} parent=1 // pred_fallthru
      _
    %701 = vsyncpa [#allocation3], 1

</llo_original>
